<compile_context>
chip_gen: v7x
topology: tpu7x:2x2x1
jax: 0.10.0
libtpu: 0.0.40
codegen_flags: <defaults>
</compile_context>

<pallas_src>
import functools

import jax
import jax.numpy as jnp
from jax.experimental import pallas as pl
from jax.experimental.pallas import tpu as pltpu

_MIB = 1024 * 1024


def _round_up(n: int, m: int) -> int:
    return ((n + m - 1) // m) * m


def _tpu_vmem_limit_and_cores():
    """Per-generation explicit VMEM limit (bytes) and TensorCores per chip."""
    kind = ""
    try:
        kind = jax.devices()[0].device_kind.lower()
    except Exception:
        pass
    if "v7" in kind:                      # v7x: 64 MiB physical per TC, 2 TCs
        return 44 * _MIB, 2
    if "v6" in kind:                      # v6e: single TC, 128 MiB physical
        return 64 * _MIB, 1
    if "v5p" in kind or "v4" in kind:     # megacore chips: 2 TCs
        return 64 * _MIB, 2
    if "v5" in kind:                      # v5e / v5 lite: single TC
        return 32 * _MIB, 1
    return 16 * _MIB, 1                   # unknown: stay under smallest default


def policy_kernel(x_ref, w1_ref, b1_ref, w2_ref, b2_ref, wa_ref, ba_ref,
                  feats_ref, actions_ref, *, compute_dtype):
    # fe: Linear -> ReLU -> Linear -> ReLU  (MXU matmuls, f32 accumulation)
    x = x_ref[...].astype(compute_dtype)
    h1 = jnp.dot(x, w1_ref[...], preferred_element_type=jnp.float32) + b1_ref[...]
    h1 = jnp.maximum(h1, 0.0)
    feats = jnp.dot(h1.astype(compute_dtype), w2_ref[...],
                    preferred_element_type=jnp.float32) + b2_ref[...]
    feats = jnp.maximum(feats, 0.0)
    feats_ref[...] = feats.astype(feats_ref.dtype)
    # an: Linear action head on the extracted features
    actions = jnp.dot(feats.astype(compute_dtype), wa_ref[...],
                      preferred_element_type=jnp.float32) + ba_ref[...]
    actions_ref[...] = actions.astype(actions_ref.dtype)


def prepare_policy_params(params, compute_dtype=jnp.bfloat16):
    """One-time (init-time) weight prep.

    nn.Linear weights (out, in) -> (in, out), matmul operands cast to
    compute_dtype, biases kept f32 as (1, out).  Call once, reuse per step.
    """
    f32 = jnp.float32
    return {
        "w1": jnp.asarray(params["fe_w1"]).T.astype(compute_dtype),
        "b1": jnp.asarray(params["fe_b1"], f32)[None, :],
        "w2": jnp.asarray(params["fe_w2"]).T.astype(compute_dtype),
        "b2": jnp.asarray(params["fe_b2"], f32)[None, :],
        "wa": jnp.asarray(params["an_w"]).T.astype(compute_dtype),
        "ba": jnp.asarray(params["an_b"], f32)[None, :],
    }


def extracted_model_policy(x, prepared):
    """Returns (feats, actions), matching ExtractedModelPolicy.forward(x)."""
    B, D = x.shape
    H = prepared["w1"].shape[1]
    A = prepared["wa"].shape[1]
    compute_dtype = prepared["w1"].dtype
    itemsize = jnp.dtype(compute_dtype).itemsize

    vmem_limit, n_cores = _tpu_vmem_limit_and_cores()

    # --- batch tile: tight and generation-aware ---------------------------
    SUB = 16                                   # bf16 packs 2 rows per sublane
    bt = _round_up(max(pl.cdiv(B, n_cores), 1), SUB)

    # VMEM accounting: x/feats/actions tiles are double-buffered by the
    # pipeline; grid-invariant weights are DMA'd once but budgeted with two
    # buffers to stay conservative; plus in-kernel f32/bf16 intermediates.
    weight_bytes = 2 * ((D * H + H * H + H * A) * itemsize + (2 * H + A) * 4)

    def step_bytes(t):
        io = 2 * t * (D + H + A) * 4               # double-buffered I/O tiles
        inter = t * H * (2 * 4 + 2 * itemsize)     # h1/feats f32 + bf16 casts
        return io + inter

    budget = max(vmem_limit - weight_bytes - 4 * _MIB, 2 * _MIB)
    while bt > SUB and step_bytes(bt) > budget:
        bt = _round_up(bt // 2, SUB)

    Bp = _round_up(B, bt)          # pad rows only; tile is tight so waste < bt
    grid = (Bp // bt,)
    xp = x if Bp == B else jnp.pad(x, ((0, Bp - B), (0, 0)))

    row = lambda i: (i, 0)
    rep = lambda i: (0, 0)

    feats_p, actions_p = pl.pallas_call(
        functools.partial(policy_kernel, compute_dtype=compute_dtype),
        out_shape=(
            jax.ShapeDtypeStruct((Bp, H), jnp.float32),
            jax.ShapeDtypeStruct((Bp, A), jnp.float32),
        ),
        grid_spec=pltpu.PrefetchScalarGridSpec(
            num_scalar_prefetch=0,
            grid=grid,
            in_specs=[
                pl.BlockSpec((bt, D), row),   # x tile (f32, cast in-kernel)
                pl.BlockSpec((D, H), rep),    # fe layer 1 weight (grid-invariant)
                pl.BlockSpec((1, H), rep),    # fe layer 1 bias
                pl.BlockSpec((H, H), rep),    # fe layer 2 weight
                pl.BlockSpec((1, H), rep),    # fe layer 2 bias
                pl.BlockSpec((H, A), rep),    # action-net weight
                pl.BlockSpec((1, A), rep),    # action-net bias
            ],
            out_specs=[
                pl.BlockSpec((bt, H), row),   # feats  (real width, f32)
                pl.BlockSpec((bt, A), row),   # actions (real width, f32)
            ],
        ),
        compiler_params=pltpu.CompilerParams(
            dimension_semantics=("parallel",),   # batch axis: megacore-shardable
            vmem_limit_bytes=vmem_limit,
        ),
    )(xp, prepared["w1"], prepared["b1"], prepared["w2"], prepared["b2"],
      prepared["wa"], prepared["ba"])

    if Bp != B:
        feats_p, actions_p = feats_p[:B], actions_p[:B]
    return feats_p, actions_p


def _reference(x, params):
    h1 = jnp.maximum(x @ params["fe_w1"].T + params["fe_b1"], 0.0)
    feats = jnp.maximum(h1 @ params["fe_w2"].T + params["fe_b2"], 0.0)
    actions = feats @ params["an_w"].T + params["an_b"]
    return feats, actions


if __name__ == "__main__":
    # Batch deliberately not a multiple of 16 -> exercises the row padding;
    # on a 2-TC chip the grid has 2 balanced steps, on single-TC chips 1 step.
    B, D, H, A = 300, 32, 64, 16  # batch, obs dim, feature dim, action dim

    key = jax.random.PRNGKey(0)
    kx, k1, k2, k3, k4, k5, k6 = jax.random.split(key, 7)

    x = jax.random.normal(kx, (B, D), dtype=jnp.float32)
    params = {
        # nn.Linear convention: weight is (out_features, in_features)
        "fe_w1": jax.random.normal(k1, (H, D), dtype=jnp.float32) * 0.1,
        "fe_b1": jax.random.normal(k2, (H,), dtype=jnp.float32) * 0.1,
        "fe_w2": jax.random.normal(k3, (H, H), dtype=jnp.float32) * 0.1,
        "fe_b2": jax.random.normal(k4, (H,), dtype=jnp.float32) * 0.1,
        "an_w": jax.random.normal(k5, (A, H), dtype=jnp.float32) * 0.1,
        "an_b": jax.random.normal(k6, (A,), dtype=jnp.float32) * 0.1,
    }

    ref_feats, ref_actions = _reference(x, params)

    # 1) exactness check: f32 matmul operands end-to-end
    prep32 = prepare_policy_params(params, compute_dtype=jnp.float32)
    feats32, actions32 = extracted_model_policy(x, prep32)
    jax.block_until_ready((feats32, actions32))
    assert feats32.shape == (B, H) and actions32.shape == (B, A)
    assert jnp.allclose(feats32, ref_feats, atol=1e-5, rtol=1e-5)
    assert jnp.allclose(actions32, ref_actions, atol=1e-5, rtol=1e-5)

    # 2) default (performance) path: weights prepared once (bf16 operands,
    #    f32 accumulation), jitted apply reused per call.
    prep = prepare_policy_params(params)          # bf16, hoisted out of hot path
    fwd = jax.jit(extracted_model_policy)
    feats, actions = fwd(x, prep)
    jax.block_until_ready((feats, actions))
    assert feats.shape == (B, H) and actions.shape == (B, A)
    # tightened bf16 tolerance (K=32/64 accumulations -> error ~1e-2 or better)
    assert jnp.allclose(feats, ref_feats, atol=2e-2, rtol=2e-2)
    assert jnp.allclose(actions, ref_actions, atol=2e-2, rtol=2e-2)

    print("KERNEL_OK")
</pallas_src>

<mosaic_0001>
module attributes {stable_mosaic.version = 11 : i64} {
  func.func @policy_kernel(%arg0: i32, %arg1: memref<304x32xf32, #tpu.memory_space<vmem>>, %arg2: memref<32x64xf32, #tpu.memory_space<vmem>>, %arg3: memref<1x64xf32, #tpu.memory_space<vmem>>, %arg4: memref<64x64xf32, #tpu.memory_space<vmem>>, %arg5: memref<1x64xf32, #tpu.memory_space<vmem>>, %arg6: memref<64x16xf32, #tpu.memory_space<vmem>>, %arg7: memref<1x16xf32, #tpu.memory_space<vmem>>, %arg8: memref<304x64xf32, #tpu.memory_space<vmem>>, %arg9: memref<304x16xf32, #tpu.memory_space<vmem>>) attributes {dimension_semantics = [#tpu.dimension_semantics<parallel>], iteration_bounds = array<i64: 1>, scalar_prefetch = 0 : i64, scratch_operands = 0 : i64, tpu.core_type = #tpu.core_type<tc>, window_params = [{transform_indices = @transform_0, window_bounds = array<i64: 304, 32>}, {pipeline_mode = #tpu.pipeline_mode<synchronous>, transform_indices = @transform_1, window_bounds = array<i64: 32, 64>}, {pipeline_mode = #tpu.pipeline_mode<synchronous>, transform_indices = @transform_2, window_bounds = array<i64: 1, 64>}, {pipeline_mode = #tpu.pipeline_mode<synchronous>, transform_indices = @transform_3, window_bounds = array<i64: 64, 64>}, {pipeline_mode = #tpu.pipeline_mode<synchronous>, transform_indices = @transform_4, window_bounds = array<i64: 1, 64>}, {pipeline_mode = #tpu.pipeline_mode<synchronous>, transform_indices = @transform_5, window_bounds = array<i64: 64, 16>}, {pipeline_mode = #tpu.pipeline_mode<synchronous>, transform_indices = @transform_6, window_bounds = array<i64: 1, 16>}, {transform_indices = @transform_7, window_bounds = array<i64: 304, 64>}, {transform_indices = @transform_8, window_bounds = array<i64: 304, 16>}]} {
    %c0 = arith.constant 0 : index
    %c0_0 = arith.constant 0 : index
    %0 = vector.load %arg1[%c0, %c0_0] : memref<304x32xf32, #tpu.memory_space<vmem>>, vector<304x32xf32>
    %c0_1 = arith.constant 0 : index
    %c0_2 = arith.constant 0 : index
    %1 = vector.load %arg2[%c0_1, %c0_2] : memref<32x64xf32, #tpu.memory_space<vmem>>, vector<32x64xf32>
    %cst = arith.constant dense<0.000000e+00> : vector<304x64xf32>
    %2 = tpu.matmul %0, %1, %cst {dimension_numbers = #tpu.dot_dimension_numbers<[1], [0], [0], [1], [0, 0, 1, 1], [], []>} : vector<304x32xf32>, vector<32x64xf32>, vector<304x64xf32> -> vector<304x64xf32>
    %c0_3 = arith.constant 0 : index
    %c0_4 = arith.constant 0 : index
    %3 = vector.load %arg3[%c0_3, %c0_4] : memref<1x64xf32, #tpu.memory_space<vmem>>, vector<1x64xf32>
    %4 = vector.broadcast %3 : vector<1x64xf32> to vector<304x64xf32>
    %5 = arith.addf %2, %4 : vector<304x64xf32>
    %cst_5 = arith.constant 0.000000e+00 : f32
    %6 = vector.broadcast %cst_5 : f32 to vector<304x64xf32>
    %7 = arith.maximumf %5, %6 : vector<304x64xf32>
    %c0_6 = arith.constant 0 : index
    %c0_7 = arith.constant 0 : index
    %8 = vector.load %arg4[%c0_6, %c0_7] : memref<64x64xf32, #tpu.memory_space<vmem>>, vector<64x64xf32>
    %cst_8 = arith.constant dense<0.000000e+00> : vector<304x64xf32>
    %9 = tpu.matmul %7, %8, %cst_8 {dimension_numbers = #tpu.dot_dimension_numbers<[1], [0], [0], [1], [0, 0, 1, 1], [], []>} : vector<304x64xf32>, vector<64x64xf32>, vector<304x64xf32> -> vector<304x64xf32>
    %c0_9 = arith.constant 0 : index
    %c0_10 = arith.constant 0 : index
    %10 = vector.load %arg5[%c0_9, %c0_10] : memref<1x64xf32, #tpu.memory_space<vmem>>, vector<1x64xf32>
    %11 = vector.broadcast %10 : vector<1x64xf32> to vector<304x64xf32>
    %12 = arith.addf %9, %11 : vector<304x64xf32>
    %cst_11 = arith.constant 0.000000e+00 : f32
    %13 = vector.broadcast %cst_11 : f32 to vector<304x64xf32>
    %14 = arith.maximumf %12, %13 : vector<304x64xf32>
    %c0_12 = arith.constant 0 : index
    %c0_13 = arith.constant 0 : index
    %15 = vector.load %arg8[%c0_12, %c0_13] : memref<304x64xf32, #tpu.memory_space<vmem>>, vector<304x64xf32>
    tpu.vector_store %arg8[%c0_12, %c0_13], %14 {strides = array<i32>} : memref<304x64xf32, #tpu.memory_space<vmem>>, vector<304x64xf32>,
    %c0_14 = arith.constant 0 : index
    %c0_15 = arith.constant 0 : index
    %16 = vector.load %arg6[%c0_14, %c0_15] : memref<64x16xf32, #tpu.memory_space<vmem>>, vector<64x16xf32>
    %cst_16 = arith.constant dense<0.000000e+00> : vector<304x16xf32>
    %17 = tpu.matmul %14, %16, %cst_16 {dimension_numbers = #tpu.dot_dimension_numbers<[1], [0], [0], [1], [0, 0, 1, 1], [], []>} : vector<304x64xf32>, vector<64x16xf32>, vector<304x16xf32> -> vector<304x16xf32>
    %c0_17 = arith.constant 0 : index
    %c0_18 = arith.constant 0 : index
    %18 = vector.load %arg7[%c0_17, %c0_18] : memref<1x16xf32, #tpu.memory_space<vmem>>, vector<1x16xf32>
    %19 = vector.broadcast %18 : vector<1x16xf32> to vector<304x16xf32>
    %20 = arith.addf %17, %19 : vector<304x16xf32>
    %c0_19 = arith.constant 0 : index
    %c0_20 = arith.constant 0 : index
    %21 = vector.load %arg9[%c0_19, %c0_20] : memref<304x16xf32, #tpu.memory_space<vmem>>, vector<304x16xf32>
    tpu.vector_store %arg9[%c0_19, %c0_20], %20 {strides = array<i32>} : memref<304x16xf32, #tpu.memory_space<vmem>>, vector<304x16xf32>,
    return
  }
  func.func @transform_0(%arg0: i32) -> (i32, i32) {
    %c0_i32 = arith.constant 0 : i32
    %c0_i32_0 = arith.constant 0 : i32
    return %arg0, %c0_i32 : i32, i32
  }
  func.func @transform_1(%arg0: i32) -> (i32, i32) {
    %c0_i32 = arith.constant 0 : i32
    %c0_i32_0 = arith.constant 0 : i32
    %c0_i32_1 = arith.constant 0 : i32
    return %c0_i32, %c0_i32_0 : i32, i32
  }
  func.func @transform_2(%arg0: i32) -> (i32, i32) {
    %c0_i32 = arith.constant 0 : i32
    %c0_i32_0 = arith.constant 0 : i32
    %c0_i32_1 = arith.constant 0 : i32
    return %c0_i32, %c0_i32_0 : i32, i32
  }
  func.func @transform_3(%arg0: i32) -> (i32, i32) {
    %c0_i32 = arith.constant 0 : i32
    %c0_i32_0 = arith.constant 0 : i32
    %c0_i32_1 = arith.constant 0 : i32
    return %c0_i32, %c0_i32_0 : i32, i32
  }
  func.func @transform_4(%arg0: i32) -> (i32, i32) {
    %c0_i32 = arith.constant 0 : i32
    %c0_i32_0 = arith.constant 0 : i32
    %c0_i32_1 = arith.constant 0 : i32
    return %c0_i32, %c0_i32_0 : i32, i32
  }
  func.func @transform_5(%arg0: i32) -> (i32, i32) {
    %c0_i32 = arith.constant 0 : i32
    %c0_i32_0 = arith.constant 0 : i32
    %c0_i32_1 = arith.constant 0 : i32
    return %c0_i32, %c0_i32_0 : i32, i32
  }
  func.func @transform_6(%arg0: i32) -> (i32, i32) {
    %c0_i32 = arith.constant 0 : i32
    %c0_i32_0 = arith.constant 0 : i32
    %c0_i32_1 = arith.constant 0 : i32
    return %c0_i32, %c0_i32_0 : i32, i32
  }
  func.func @transform_7(%arg0: i32) -> (i32, i32) {
    %c0_i32 = arith.constant 0 : i32
    %c0_i32_0 = arith.constant 0 : i32
    return %arg0, %c0_i32 : i32, i32
  }
  func.func @transform_8(%arg0: i32) -> (i32, i32) {
    %c0_i32 = arith.constant 0 : i32
    %c0_i32_0 = arith.constant 0 : i32
    return %arg0, %c0_i32 : i32, i32
  }
}

</mosaic_0001>

<llo_original>
// kernel: tpu_custom_call.1
$region0: #{tpu_custom_call.1}
  #allocation0 [shape = 'u32[]', space=smem, size = 0x4, offset = 0x4, fixed_abs, tag = 'smem constant byte address 0x4 - core index']
  #allocation1 [shape = 'u32[144,128]{1,0:T(1,128)}', space=vmem, size = 0x12000, scoped, tag = 'internal scratch']
  %s0 = inlined_call_operand.vmem [shape: f32[304,32], index: 0, kind: input, shape index: {}]
  %s1 = inlined_call_operand.vmem [shape: f32[32,64], index: 1, kind: input, shape index: {}]
  %s2 = inlined_call_operand.vmem [shape: f32[1,64], index: 2, kind: input, shape index: {}]
  %s3 = inlined_call_operand.vmem [shape: f32[64,64], index: 3, kind: input, shape index: {}]
  %s4 = inlined_call_operand.vmem [shape: f32[1,64], index: 4, kind: input, shape index: {}]
  %s5 = inlined_call_operand.vmem [shape: f32[64,16], index: 5, kind: input, shape index: {}]
  %s6 = inlined_call_operand.vmem [shape: f32[1,16], index: 6, kind: input, shape index: {}]
  %s7 = inlined_call_operand.vmem [shape: f32[304,64], index: 7, kind: output, shape index: {0}]
  %s8 = inlined_call_operand.vmem [shape: f32[304,16], index: 8, kind: output, shape index: {1}]
  %9 = xla_tuple %s7, %s8
  %s10 = sld [smem:[#allocation0]]
  $region46: #{tpu_custom_call.1} parent=0
    _
  %s12 = ssub.s32 1, %s10
  %s13 = scalar_select 0, %s12, %s10
  // Predicated region
  $region2: #{tpu_custom_call.1} parent=0 // pred_check
    _
  $region3: #{tpu_custom_call.1} parent=0 // pred_check_branch
    %15 = sbr.rel (0) target = $region5
  $region4: #{tpu_custom_call.1} parent=0 // pred_region
    _
  $region5: #{tpu_custom_call.1} parent=0 // pred_fallthru
    _
  // Predicated region
  $region6: #{tpu_custom_call.1} parent=0 // pred_check
    _
  $region7: #{tpu_custom_call.1} parent=0 // pred_check_branch
    %17 = sbr.rel (0) target = $region9
  $region8: #{tpu_custom_call.1} parent=0 // pred_region
    _
  $region9: #{tpu_custom_call.1} parent=0 // pred_fallthru
    _
  // Predicated region
  $region10: #{tpu_custom_call.1} parent=0 // pred_check
    _
  $region11: #{tpu_custom_call.1} parent=0 // pred_check_branch
    %19 = sbr.rel (0) target = $region13
  $region12: #{tpu_custom_call.1} parent=0 // pred_region
    _
  $region13: #{tpu_custom_call.1} parent=0 // pred_fallthru
    _
  // Predicated region
  $region14: #{tpu_custom_call.1} parent=0 // pred_check
    _
  $region15: #{tpu_custom_call.1} parent=0 // pred_check_branch
    %21 = sbr.rel (0) target = $region17
  $region16: #{tpu_custom_call.1} parent=0 // pred_region
    _
  $region17: #{tpu_custom_call.1} parent=0 // pred_fallthru
    _
  // Predicated region
  $region18: #{tpu_custom_call.1} parent=0 // pred_check
    _
  $region19: #{tpu_custom_call.1} parent=0 // pred_check_branch
    %23 = sbr.rel (0) target = $region21
  $region20: #{tpu_custom_call.1} parent=0 // pred_region
    _
  $region21: #{tpu_custom_call.1} parent=0 // pred_fallthru
    _
  // Predicated region
  $region22: #{tpu_custom_call.1} parent=0 // pred_check
    _
  $region23: #{tpu_custom_call.1} parent=0 // pred_check_branch
    %25 = sbr.rel (0) target = $region25
  $region24: #{tpu_custom_call.1} parent=0 // pred_region
    _
  $region25: #{tpu_custom_call.1} parent=0 // pred_fallthru
    _
  // Predicated region
  $region26: #{tpu_custom_call.1} parent=0 // pred_check
    _
  $region27: #{tpu_custom_call.1} parent=0 // pred_check_branch
    %27 = sbr.rel (0) target = $region29
  $region28: #{tpu_custom_call.1} parent=0 // pred_region
    _
  $region29: #{tpu_custom_call.1} parent=0 // pred_fallthru
    _
  %v28 = vld [vmem:[%s0] sm:$0xff]
  %v29 = vld [vmem:[%s0 + $0x8] sm:$0xff]
  %v30 = vld [vmem:[%s0 + $0x10] sm:$0xff]
  %v31 = vld [vmem:[%s0 + $0x18] sm:$0xff]
  %v32 = vld [vmem:[%s0 + $0x20] sm:$0xff]
  %v33 = vld [vmem:[%s0 + $0x28] sm:$0xff]
  %v34 = vld [vmem:[%s0 + $0x30] sm:$0xff]
  %v35 = vld [vmem:[%s0 + $0x38] sm:$0xff]
  %v36 = vld [vmem:[%s0 + $0x40] sm:$0xff]
  %v37 = vld [vmem:[%s0 + $0x48] sm:$0xff]
  %v38 = vld [vmem:[%s0 + $0x50] sm:$0xff]
  %v39 = vld [vmem:[%s0 + $0x58] sm:$0xff]
  %v40 = vld [vmem:[%s0 + $0x60] sm:$0xff]
  %v41 = vld [vmem:[%s0 + $0x68] sm:$0xff]
  %v42 = vld [vmem:[%s0 + $0x70] sm:$0xff]
  %v43 = vld [vmem:[%s0 + $0x78] sm:$0xff]
  %v44 = vld [vmem:[%s0 + $0x80] sm:$0xff]
  %v45 = vld [vmem:[%s0 + $0x88] sm:$0xff]
  %v46 = vld [vmem:[%s0 + $0x90] sm:$0xff]
  %v47 = vld [vmem:[%s0 + $0x98] sm:$0xff]
  %v48 = vld [vmem:[%s0 + $0xa0] sm:$0xff]
  %v49 = vld [vmem:[%s0 + $0xa8] sm:$0xff]
  %v50 = vld [vmem:[%s0 + $0xb0] sm:$0xff]
  %v51 = vld [vmem:[%s0 + $0xb8] sm:$0xff]
  %v52 = vld [vmem:[%s0 + $0xc0] sm:$0xff]
  %v53 = vld [vmem:[%s0 + $0xc8] sm:$0xff]
  %v54 = vld [vmem:[%s0 + $0xd0] sm:$0xff]
  %v55 = vld [vmem:[%s0 + $0xd8] sm:$0xff]
  %v56 = vld [vmem:[%s0 + $0xe0] sm:$0xff]
  %v57 = vld [vmem:[%s0 + $0xe8] sm:$0xff]
  %v58 = vld [vmem:[%s0 + $0xf0] sm:$0xff]
  %v59 = vld [vmem:[%s0 + $0xf8] sm:$0xff]
  %v60 = vld [vmem:[%s0 + $0x100] sm:$0xff]
  %v61 = vld [vmem:[%s0 + $0x108] sm:$0xff]
  %v62 = vld [vmem:[%s0 + $0x110] sm:$0xff]
  %v63 = vld [vmem:[%s0 + $0x118] sm:$0xff]
  %v64 = vld [vmem:[%s0 + $0x120] sm:$0xff]
  %v65 = vld [vmem:[%s0 + $0x128] sm:$0xff]
  %v66 = vld [vmem:[%s1] sm:$0xff]
  %v67 = vld [vmem:[%s1 + $0x8] sm:$0xff]
  %v68 = vld [vmem:[%s1 + $0x10] sm:$0xff]
  %v69 = vld [vmem:[%s1 + $0x18] sm:$0xff]
  %v70 = vld [vmem:[%s2] sm:$0x1]
  %v72 = vlaneseq
  %v73 = vshrl.u32 %v72, 7
  %v74 = vsub.s32 0, %v73
  %v75 = vrot.slane %v70, %v74
  %vm77 = vcmask 261120
  %v79 = vsel %vm77, %v28, 0
  %v82 = vsel %vm77, %v29, 0
  %v85 = vsel %vm77, %v30, 0
  %v88 = vsel %vm77, %v31, 0
  %v91 = vsel %vm77, %v32, 0
  %v94 = vsel %vm77, %v33, 0
  %v97 = vsel %vm77, %v34, 0
  %v100 = vsel %vm77, %v35, 0
  %v103 = vsel %vm77, %v36, 0
  %v106 = vsel %vm77, %v37, 0
  %v109 = vsel %vm77, %v38, 0
  %v112 = vsel %vm77, %v39, 0
  %v115 = vsel %vm77, %v40, 0
  %v118 = vsel %vm77, %v41, 0
  %v121 = vsel %vm77, %v42, 0
  %v124 = vsel %vm77, %v43, 0
  %v127 = vsel %vm77, %v44, 0
  %v130 = vsel %vm77, %v45, 0
  %v133 = vsel %vm77, %v46, 0
  %v136 = vsel %vm77, %v47, 0
  %v139 = vsel %vm77, %v48, 0
  %v142 = vsel %vm77, %v49, 0
  %v145 = vsel %vm77, %v50, 0
  %v148 = vsel %vm77, %v51, 0
  %v151 = vsel %vm77, %v52, 0
  %v154 = vsel %vm77, %v53, 0
  %v157 = vsel %vm77, %v54, 0
  %v160 = vsel %vm77, %v55, 0
  %v163 = vsel %vm77, %v56, 0
  %v166 = vsel %vm77, %v57, 0
  %v169 = vsel %vm77, %v58, 0
  %v172 = vsel %vm77, %v59, 0
  %v175 = vsel %vm77, %v60, 0
  %v178 = vsel %vm77, %v61, 0
  %v181 = vsel %vm77, %v62, 0
  %v184 = vsel %vm77, %v63, 0
  %v187 = vsel %vm77, %v64, 0
  %v190 = vsel %vm77, %v65, 0
  %192 = vmatprep.subr.mxu0 0.0
  %193 = vmatpush1.msra.mxu0 %v66
  %194 = vmatprep.subr.mxu0 0.0
  %195 = vmatpush1.msra.mxu0 %v67
  %196 = vmatprep.subr.mxu0 0.0
  %197 = vmatpush1.msra.mxu0 %v68
  %198 = vmatprep.subr.mxu0 0.0
  %199 = vmatpush1.msra.mxu0 %v69
  %200 = vmatprep.subr.mxu0 0.0
  %201 = vmatpush1.msra.mxu0 0.0
  %202 = vmatprep.subr.mxu0 0.0
  %203 = vmatpush1.msra.mxu0 0.0
  %204 = vmatprep.subr.mxu0 0.0
  %205 = vmatpush1.msra.mxu0 0.0
  %206 = vmatprep.subr.mxu0 0.0
  %207 = vmatpush1.msra.mxu0 0.0
  %208 = vmatprep.subr.mxu0 0.0
  %209 = vmatpush1.msra.mxu0 0.0
  %210 = vmatprep.subr.mxu0 0.0
  %211 = vmatpush1.msra.mxu0 0.0
  %212 = vmatprep.subr.mxu0 0.0
  %213 = vmatpush1.msra.mxu0 0.0
  %214 = vmatprep.subr.mxu0 0.0
  %215 = vmatpush1.msra.mxu0 0.0
  %216 = vmatprep.subr.mxu0 0.0
  %217 = vmatpush1.msra.mxu0 0.0
  %218 = vmatprep.subr.mxu0 0.0
  %219 = vmatpush1.msra.mxu0 0.0
  %220 = vmatprep.subr.mxu0 0.0
  %221 = vmatpush1.msra.mxu0 0.0
  %222 = vmatprep.subr.mxu0 0.0
  %223 = vmatpush1.msra.mxu0 0.0
  %224 = vmatprep.subr.mxu0 0.0
  %225 = vmatpush1.msra.mxu0 0.0
  %226 = vmatprep.subr.mxu0 0.0
  %227 = vmatpush1.msra.mxu0 0.0
  %228 = vmatprep.subr.mxu0 0.0
  %229 = vmatpush1.msra.mxu0 0.0
  %230 = vmatprep.subr.mxu0 0.0
  %231 = vmatpush1.msra.mxu0 0.0
  %232 = vmatprep.subr.mxu0 0.0
  %233 = vmatpush1.msra.mxu0 0.0
  %234 = vmatprep.subr.mxu0 0.0
  %235 = vmatpush1.msra.mxu0 0.0
  %236 = vmatprep.subr.mxu0 0.0
  %237 = vmatpush1.msra.mxu0 0.0
  %238 = vmatprep.subr.mxu0 0.0
  %239 = vmatpush1.msra.mxu0 0.0
  %240 = vmatprep.subr.mxu0 0.0
  %241 = vmatpush1.msra.mxu0 0.0
  %242 = vmatprep.subr.mxu0 0.0
  %243 = vmatpush1.msra.mxu0 0.0
  %244 = vmatprep.subr.mxu0 0.0
  %245 = vmatpush1.msra.mxu0 0.0
  %246 = vmatprep.subr.mxu0 0.0
  %247 = vmatpush1.msra.mxu0 0.0
  %248 = vmatprep.subr.mxu0 0.0
  %249 = vmatpush1.msra.mxu0 0.0
  %250 = vmatprep.subr.mxu0 0.0
  %251 = vmatpush1.msra.mxu0 0.0
  %252 = vmatprep.subr.mxu0 0.0
  %253 = vmatpush1.msra.mxu0 0.0
  %254 = vmatprep.subr.mxu0 0.0
  %255 = vmatpush1.msra.mxu0 0.0
  %256 = vmatprep.mubr.f32.mxu0 0.0
  %257 = vmatmul.mubr.f32.gmra.mrb[0].mxu0 %v79
  %v258 = vpop.f32.mrb[0].mxu0
  %v259 = vadd.f32 %v75, %v258
  %v260 = vpop.f32.mrb[0].mxu0
  %261 = vmatprep.mubr.f32.mxu0 0.0
  %262 = vmatmul.mubr.f32.gmra.mrb[0].mxu0 %v82
  %v263 = vpop.f32.mrb[0].mxu0
  %v264 = vadd.f32 %v75, %v263
  %v265 = vpop.f32.mrb[0].mxu0
  %266 = vmatprep.mubr.f32.mxu0 0.0
  %267 = vmatmul.mubr.f32.gmra.mrb[0].mxu0 %v85
  %v268 = vpop.f32.mrb[0].mxu0
  %v269 = vadd.f32 %v75, %v268
  %v270 = vpop.f32.mrb[0].mxu0
  %271 = vmatprep.mubr.f32.mxu0 0.0
  %272 = vmatmul.mubr.f32.gmra.mrb[0].mxu0 %v88
  %v273 = vpop.f32.mrb[0].mxu0
  %v274 = vadd.f32 %v75, %v273
  %v275 = vpop.f32.mrb[0].mxu0
  %276 = vmatprep.mubr.f32.mxu0 0.0
  %277 = vmatmul.mubr.f32.gmra.mrb[0].mxu0 %v91
  %v278 = vpop.f32.mrb[0].mxu0
  %v279 = vadd.f32 %v75, %v278
  %v280 = vpop.f32.mrb[0].mxu0
  %281 = vmatprep.mubr.f32.mxu0 0.0
  %282 = vmatmul.mubr.f32.gmra.mrb[0].mxu0 %v94
  %v283 = vpop.f32.mrb[0].mxu0
  %v284 = vadd.f32 %v75, %v283
  %v285 = vpop.f32.mrb[0].mxu0
  %286 = vmatprep.mubr.f32.mxu0 0.0
  %287 = vmatmul.mubr.f32.gmra.mrb[0].mxu0 %v97
  %v288 = vpop.f32.mrb[0].mxu0
  %v289 = vadd.f32 %v75, %v288
  %v290 = vpop.f32.mrb[0].mxu0
  %291 = vmatprep.mubr.f32.mxu0 0.0
  %292 = vmatmul.mubr.f32.gmra.mrb[0].mxu0 %v100
  %v293 = vpop.f32.mrb[0].mxu0
  %v294 = vadd.f32 %v75, %v293
  %v295 = vpop.f32.mrb[0].mxu0
  %296 = vmatprep.mubr.f32.mxu0 0.0
  %297 = vmatmul.mubr.f32.gmra.mrb[0].mxu0 %v103
  %v298 = vpop.f32.mrb[0].mxu0
  %v299 = vadd.f32 %v75, %v298
  %v300 = vpop.f32.mrb[0].mxu0
  %301 = vmatprep.mubr.f32.mxu0 0.0
  %302 = vmatmul.mubr.f32.gmra.mrb[0].mxu0 %v106
  %v303 = vpop.f32.mrb[0].mxu0
  %v304 = vadd.f32 %v75, %v303
  %v305 = vpop.f32.mrb[0].mxu0
  %306 = vmatprep.mubr.f32.mxu0 0.0
  %307 = vmatmul.mubr.f32.gmra.mrb[0].mxu0 %v109
  %v308 = vpop.f32.mrb[0].mxu0
  %v309 = vadd.f32 %v75, %v308
  %v310 = vpop.f32.mrb[0].mxu0
  %311 = vmatprep.mubr.f32.mxu0 0.0
  %312 = vmatmul.mubr.f32.gmra.mrb[0].mxu0 %v112
  %v313 = vpop.f32.mrb[0].mxu0
  %v314 = vadd.f32 %v75, %v313
  %v315 = vpop.f32.mrb[0].mxu0
  %316 = vmatprep.mubr.f32.mxu0 0.0
  %317 = vmatmul.mubr.f32.gmra.mrb[0].mxu0 %v115
  %v318 = vpop.f32.mrb[0].mxu0
  %v319 = vadd.f32 %v75, %v318
  %v320 = vpop.f32.mrb[0].mxu0
  %321 = vmatprep.mubr.f32.mxu0 0.0
  %322 = vmatmul.mubr.f32.gmra.mrb[0].mxu0 %v118
  %v323 = vpop.f32.mrb[0].mxu0
  %v324 = vadd.f32 %v75, %v323
  %v325 = vpop.f32.mrb[0].mxu0
  %326 = vmatprep.mubr.f32.mxu0 0.0
  %327 = vmatmul.mubr.f32.gmra.mrb[0].mxu0 %v121
  %v328 = vpop.f32.mrb[0].mxu0
  %v329 = vadd.f32 %v75, %v328
  %v330 = vpop.f32.mrb[0].mxu0
  %331 = vmatprep.mubr.f32.mxu0 0.0
  %332 = vmatmul.mubr.f32.gmra.mrb[0].mxu0 %v124
  %v333 = vpop.f32.mrb[0].mxu0
  %v334 = vadd.f32 %v75, %v333
  %v335 = vpop.f32.mrb[0].mxu0
  %336 = vmatprep.mubr.f32.mxu0 0.0
  %337 = vmatmul.mubr.f32.gmra.mrb[0].mxu0 %v127
  %v338 = vpop.f32.mrb[0].mxu0
  %v339 = vadd.f32 %v75, %v338
  %v340 = vpop.f32.mrb[0].mxu0
  %341 = vmatprep.mubr.f32.mxu0 0.0
  %342 = vmatmul.mubr.f32.gmra.mrb[0].mxu0 %v130
  %v343 = vpop.f32.mrb[0].mxu0
  %v344 = vadd.f32 %v75, %v343
  %v345 = vpop.f32.mrb[0].mxu0
  %346 = vmatprep.mubr.f32.mxu0 0.0
  %347 = vmatmul.mubr.f32.gmra.mrb[0].mxu0 %v133
  %v348 = vpop.f32.mrb[0].mxu0
  %v349 = vadd.f32 %v75, %v348
  %v350 = vpop.f32.mrb[0].mxu0
  %351 = vmatprep.mubr.f32.mxu0 0.0
  %352 = vmatmul.mubr.f32.gmra.mrb[0].mxu0 %v136
  %v353 = vpop.f32.mrb[0].mxu0
  %v354 = vadd.f32 %v75, %v353
  %v355 = vpop.f32.mrb[0].mxu0
  %356 = vmatprep.mubr.f32.mxu0 0.0
  %357 = vmatmul.mubr.f32.gmra.mrb[0].mxu0 %v139
  %v358 = vpop.f32.mrb[0].mxu0
  %v359 = vadd.f32 %v75, %v358
  %v360 = vpop.f32.mrb[0].mxu0
  %361 = vmatprep.mubr.f32.mxu0 0.0
  %362 = vmatmul.mubr.f32.gmra.mrb[0].mxu0 %v142
  %v363 = vpop.f32.mrb[0].mxu0
  %v364 = vadd.f32 %v75, %v363
  %v365 = vpop.f32.mrb[0].mxu0
  %366 = vmatprep.mubr.f32.mxu0 0.0
  %367 = vmatmul.mubr.f32.gmra.mrb[0].mxu0 %v145
  %v368 = vpop.f32.mrb[0].mxu0
  %v369 = vadd.f32 %v75, %v368
  %v370 = vpop.f32.mrb[0].mxu0
  %371 = vmatprep.mubr.f32.mxu0 0.0
  %372 = vmatmul.mubr.f32.gmra.mrb[0].mxu0 %v148
  %v373 = vpop.f32.mrb[0].mxu0
  %v374 = vadd.f32 %v75, %v373
  %v375 = vpop.f32.mrb[0].mxu0
  %376 = vmatprep.mubr.f32.mxu0 0.0
  %377 = vmatmul.mubr.f32.gmra.mrb[0].mxu0 %v151
  %v378 = vpop.f32.mrb[0].mxu0
  %v379 = vadd.f32 %v75, %v378
  %v380 = vpop.f32.mrb[0].mxu0
  %381 = vmatprep.mubr.f32.mxu0 0.0
  %382 = vmatmul.mubr.f32.gmra.mrb[0].mxu0 %v154
  %v383 = vpop.f32.mrb[0].mxu0
  %v384 = vadd.f32 %v75, %v383
  %v385 = vpop.f32.mrb[0].mxu0
  %386 = vmatprep.mubr.f32.mxu0 0.0
  %387 = vmatmul.mubr.f32.gmra.mrb[0].mxu0 %v157
  %v388 = vpop.f32.mrb[0].mxu0
  %v389 = vadd.f32 %v75, %v388
  %v390 = vpop.f32.mrb[0].mxu0
  %391 = vmatprep.mubr.f32.mxu0 0.0
  %392 = vmatmul.mubr.f32.gmra.mrb[0].mxu0 %v160
  %v393 = vpop.f32.mrb[0].mxu0
  %v394 = vadd.f32 %v75, %v393
  %v395 = vpop.f32.mrb[0].mxu0
  %396 = vmatprep.mubr.f32.mxu0 0.0
  %397 = vmatmul.mubr.f32.gmra.mrb[0].mxu0 %v163
  %v398 = vpop.f32.mrb[0].mxu0
  %v399 = vadd.f32 %v75, %v398
  %v400 = vpop.f32.mrb[0].mxu0
  %401 = vmatprep.mubr.f32.mxu0 0.0
  %402 = vmatmul.mubr.f32.gmra.mrb[0].mxu0 %v166
  %v403 = vpop.f32.mrb[0].mxu0
  %v404 = vadd.f32 %v75, %v403
  %v405 = vpop.f32.mrb[0].mxu0
  %406 = vmatprep.mubr.f32.mxu0 0.0
  %407 = vmatmul.mubr.f32.gmra.mrb[0].mxu0 %v169
  %v408 = vpop.f32.mrb[0].mxu0
  %v409 = vadd.f32 %v75, %v408
  %v410 = vpop.f32.mrb[0].mxu0
  %411 = vmatprep.mubr.f32.mxu0 0.0
  %412 = vmatmul.mubr.f32.gmra.mrb[0].mxu0 %v172
  %v413 = vpop.f32.mrb[0].mxu0
  %v414 = vadd.f32 %v75, %v413
  %v415 = vpop.f32.mrb[0].mxu0
  %416 = vmatprep.mubr.f32.mxu0 0.0
  %417 = vmatmul.mubr.f32.gmra.mrb[0].mxu0 %v175
  %v418 = vpop.f32.mrb[0].mxu0
  %v419 = vadd.f32 %v75, %v418
  %v420 = vpop.f32.mrb[0].mxu0
  %421 = vmatprep.mubr.f32.mxu0 0.0
  %422 = vmatmul.mubr.f32.gmra.mrb[0].mxu0 %v178
  %v423 = vpop.f32.mrb[0].mxu0
  %v424 = vadd.f32 %v75, %v423
  %v425 = vpop.f32.mrb[0].mxu0
  %426 = vmatprep.mubr.f32.mxu0 0.0
  %427 = vmatmul.mubr.f32.gmra.mrb[0].mxu0 %v181
  %v428 = vpop.f32.mrb[0].mxu0
  %v429 = vadd.f32 %v75, %v428
  %v430 = vpop.f32.mrb[0].mxu0
  %431 = vmatprep.mubr.f32.mxu0 0.0
  %432 = vmatmul.mubr.f32.gmra.mrb[0].mxu0 %v184
  %v433 = vpop.f32.mrb[0].mxu0
  %v434 = vadd.f32 %v75, %v433
  %v435 = vpop.f32.mrb[0].mxu0
  %436 = vmatprep.mubr.f32.mxu0 0.0
  %437 = vmatmul.mubr.f32.gmra.mrb[0].mxu0 %v187
  %v438 = vpop.f32.mrb[0].mxu0
  %v439 = vadd.f32 %v75, %v438
  %v440 = vpop.f32.mrb[0].mxu0
  %441 = vmatprep.mubr.f32.mxu0 0.0
  %442 = vmatmul.mubr.f32.gmra.mrb[0].mxu0 %v190
  %v443 = vpop.f32.mrb[0].mxu0
  %v444 = vadd.f32 %v75, %v443
  %v445 = vpop.f32.mrb[0].mxu0
  %446 = vdwg.mxu0
  %v447 = vmax.f32 %v259, 0.0
  %v448 = vmax.f32 %v264, 0.0
  %v449 = vmax.f32 %v269, 0.0
  %v450 = vmax.f32 %v274, 0.0
  %v451 = vmax.f32 %v279, 0.0
  %v452 = vmax.f32 %v284, 0.0
  %v453 = vmax.f32 %v289, 0.0
  %v454 = vmax.f32 %v294, 0.0
  %v455 = vmax.f32 %v299, 0.0
  %v456 = vmax.f32 %v304, 0.0
  %v457 = vmax.f32 %v309, 0.0
  %v458 = vmax.f32 %v314, 0.0
  %v459 = vmax.f32 %v319, 0.0
  %v460 = vmax.f32 %v324, 0.0
  %v461 = vmax.f32 %v329, 0.0
  %v462 = vmax.f32 %v334, 0.0
  %v463 = vmax.f32 %v339, 0.0
  %v464 = vmax.f32 %v344, 0.0
  %v465 = vmax.f32 %v349, 0.0
  %v466 = vmax.f32 %v354, 0.0
  %v467 = vmax.f32 %v359, 0.0
  %v468 = vmax.f32 %v364, 0.0
  %v469 = vmax.f32 %v369, 0.0
  %v470 = vmax.f32 %v374, 0.0
  %v471 = vmax.f32 %v379, 0.0
  %v472 = vmax.f32 %v384, 0.0
  %v473 = vmax.f32 %v389, 0.0
  %v474 = vmax.f32 %v394, 0.0
  %v475 = vmax.f32 %v399, 0.0
  %v476 = vmax.f32 %v404, 0.0
  %v477 = vmax.f32 %v409, 0.0
  %v478 = vmax.f32 %v414, 0.0
  %v479 = vmax.f32 %v419, 0.0
  %v480 = vmax.f32 %v424, 0.0
  %v481 = vmax.f32 %v429, 0.0
  %v482 = vmax.f32 %v434, 0.0
  %v483 = vmax.f32 %v439, 0.0
  %v484 = vmax.f32 %v444, 0.0
  %v485 = vld [vmem:[%s3] sm:$0xff]
  %v486 = vld [vmem:[%s3 + $0x8] sm:$0xff]
  %v487 = vld [vmem:[%s3 + $0x10] sm:$0xff]
  %v488 = vld [vmem:[%s3 + $0x18] sm:$0xff]
  %v489 = vld [vmem:[%s3 + $0x20] sm:$0xff]
  %v490 = vld [vmem:[%s3 + $0x28] sm:$0xff]
  %v491 = vld [vmem:[%s3 + $0x30] sm:$0xff]
  %v492 = vld [vmem:[%s3 + $0x38] sm:$0xff]
  %v493 = vld [vmem:[%s4] sm:$0x1]
  %v495 = vlaneseq
  %v496 = vshrl.u32 %v495, 7
  %v497 = vsub.s32 0, %v496
  %v498 = vrot.slane %v493, %v497
  %vm500 = vcmask 523264
  %v502 = vsel %vm500, %v447, 0
  %v505 = vsel %vm500, %v448, 0
  %v508 = vsel %vm500, %v449, 0
  %v511 = vsel %vm500, %v450, 0
  %v514 = vsel %vm500, %v451, 0
  %v517 = vsel %vm500, %v452, 0
  %v520 = vsel %vm500, %v453, 0
  %v523 = vsel %vm500, %v454, 0
  %v526 = vsel %vm500, %v455, 0
  %v529 = vsel %vm500, %v456, 0
  %v532 = vsel %vm500, %v457, 0
  %v535 = vsel %vm500, %v458, 0
  %v538 = vsel %vm500, %v459, 0
  %v541 = vsel %vm500, %v460, 0
  %v544 = vsel %vm500, %v461, 0
  %v547 = vsel %vm500, %v462, 0
  %v550 = vsel %vm500, %v463, 0
  %v553 = vsel %vm500, %v464, 0
  %v556 = vsel %vm500, %v465, 0
  %v559 = vsel %vm500, %v466, 0
  %v562 = vsel %vm500, %v467, 0
  %v565 = vsel %vm500, %v468, 0
  %v568 = vsel %vm500, %v469, 0
  %v571 = vsel %vm500, %v470, 0
  %v574 = vsel %vm500, %v471, 0
  %v577 = vsel %vm500, %v472, 0
  %v580 = vsel %vm500, %v473, 0
  %v583 = vsel %vm500, %v474, 0
  %v586 = vsel %vm500, %v475, 0
  %v589 = vsel %vm500, %v476, 0
  %v592 = vsel %vm500, %v477, 0
  %v595 = vsel %vm500, %v478, 0
  %v598 = vsel %vm500, %v479, 0
  %v601 = vsel %vm500, %v480, 0
  %v604 = vsel %vm500, %v481, 0
  %v607 = vsel %vm500, %v482, 0
  %v610 = vsel %vm500, %v483, 0
  %v613 = vsel %vm500, %v484, 0
  %615 = vmatprep.subr.mxu0 0.0
  %616 = vmatpush1.msra.mxu0 %v485
  %617 = vmatprep.subr.mxu0 0.0
  %618 = vmatpush1.msra.mxu0 %v486
  %619 = vmatprep.subr.mxu0 0.0
  %620 = vmatpush1.msra.mxu0 %v487
  %621 = vmatprep.subr.mxu0 0.0
  %622 = vmatpush1.msra.mxu0 %v488
  %623 = vmatprep.subr.mxu0 0.0
  %624 = vmatpush1.msra.mxu0 %v489
  %625 = vmatprep.subr.mxu0 0.0
  %626 = vmatpush1.msra.mxu0 %v490
  %627 = vmatprep.subr.mxu0 0.0
  %628 = vmatpush1.msra.mxu0 %v491
  %629 = vmatprep.subr.mxu0 0.0
  %630 = vmatpush1.msra.mxu0 %v492
  %631 = vmatprep.subr.mxu0 0.0
  %632 = vmatpush1.msra.mxu0 0.0
  %633 = vmatprep.subr.mxu0 0.0
  %634 = vmatpush1.msra.mxu0 0.0
  %635 = vmatprep.subr.mxu0 0.0
  %636 = vmatpush1.msra.mxu0 0.0
  %637 = vmatprep.subr.mxu0 0.0
  %638 = vmatpush1.msra.mxu0 0.0
  %639 = vmatprep.subr.mxu0 0.0
  %640 = vmatpush1.msra.mxu0 0.0
  %641 = vmatprep.subr.mxu0 0.0
  %642 = vmatpush1.msra.mxu0 0.0
  %643 = vmatprep.subr.mxu0 0.0
  %644 = vmatpush1.msra.mxu0 0.0
  %645 = vmatprep.subr.mxu0 0.0
  %646 = vmatpush1.msra.mxu0 0.0
  %647 = vmatprep.subr.mxu0 0.0
  %648 = vmatpush1.msra.mxu0 0.0
  %649 = vmatprep.subr.mxu0 0.0
  %650 = vmatpush1.msra.mxu0 0.0
  %651 = vmatprep.subr.mxu0 0.0
  %652 = vmatpush1.msra.mxu0 0.0
  %653 = vmatprep.subr.mxu0 0.0
  %654 = vmatpush1.msra.mxu0 0.0
  %655 = vmatprep.subr.mxu0 0.0
  %656 = vmatpush1.msra.mxu0 0.0
  %657 = vmatprep.subr.mxu0 0.0
  %658 = vmatpush1.msra.mxu0 0.0
  %659 = vmatprep.subr.mxu0 0.0
  %660 = vmatpush1.msra.mxu0 0.0
  %661 = vmatprep.subr.mxu0 0.0
  %662 = vmatpush1.msra.mxu0 0.0
  %663 = vmatprep.subr.mxu0 0.0
  %664 = vmatpush1.msra.mxu0 0.0
  %665 = vmatprep.subr.mxu0 0.0
  %666 = vmatpush1.msra.mxu0 0.0
  %667 = vmatprep.subr.mxu0 0.0
  %668 = vmatpush1.msra.mxu0 0.0
  %669 = vmatprep.subr.mxu0 0.0
  %670 = vmatpush1.msra.mxu0 0.0
  %671 = vmatprep.subr.mxu0 0.0
  %672 = vmatpush1.msra.mxu0 0.0
  %673 = vmatprep.subr.mxu0 0.0
  %674 = vmatpush1.msra.mxu0 0.0
  %675 = vmatprep.subr.mxu0 0.0
  %676 = vmatpush1.msra.mxu0 0.0
  %677 = vmatprep.subr.mxu0 0.0
  %678 = vmatpush1.msra.mxu0 0.0
  %679 = vmatprep.mubr.f32.mxu0 0.0
  %680 = vmatmul.mubr.f32.gmra.mrb[0].mxu0 %v502
  %v681 = vpop.f32.mrb[0].mxu0
  %v682 = vadd.f32 %v498, %v681
  %v683 = vpop.f32.mrb[0].mxu0
  %684 = vmatprep.mubr.f32.mxu0 0.0
  %685 = vmatmul.mubr.f32.gmra.mrb[0].mxu0 %v505
  %v686 = vpop.f32.mrb[0].mxu0
  %v687 = vadd.f32 %v498, %v686
  %v688 = vpop.f32.mrb[0].mxu0
  %689 = vmatprep.mubr.f32.mxu0 0.0
  %690 = vmatmul.mubr.f32.gmra.mrb[0].mxu0 %v508
  %v691 = vpop.f32.mrb[0].mxu0
  %v692 = vadd.f32 %v498, %v691
  %v693 = vpop.f32.mrb[0].mxu0
  %694 = vmatprep.mubr.f32.mxu0 0.0
  %695 = vmatmul.mubr.f32.gmra.mrb[0].mxu0 %v511
  %v696 = vpop.f32.mrb[0].mxu0
  %v697 = vadd.f32 %v498, %v696
  %v698 = vpop.f32.mrb[0].mxu0
  %699 = vmatprep.mubr.f32.mxu0 0.0
  %700 = vmatmul.mubr.f32.gmra.mrb[0].mxu0 %v514
  %v701 = vpop.f32.mrb[0].mxu0
  %v702 = vadd.f32 %v498, %v701
  %v703 = vpop.f32.mrb[0].mxu0
  %704 = vmatprep.mubr.f32.mxu0 0.0
  %705 = vmatmul.mubr.f32.gmra.mrb[0].mxu0 %v517
  %v706 = vpop.f32.mrb[0].mxu0
  %v707 = vadd.f32 %v498, %v706
  %v708 = vpop.f32.mrb[0].mxu0
  %709 = vmatprep.mubr.f32.mxu0 0.0
  %710 = vmatmul.mubr.f32.gmra.mrb[0].mxu0 %v520
  %v711 = vpop.f32.mrb[0].mxu0
  %v712 = vadd.f32 %v498, %v711
  %v713 = vpop.f32.mrb[0].mxu0
  %714 = vmatprep.mubr.f32.mxu0 0.0
  %715 = vmatmul.mubr.f32.gmra.mrb[0].mxu0 %v523
  %v716 = vpop.f32.mrb[0].mxu0
  %v717 = vadd.f32 %v498, %v716
  %v718 = vpop.f32.mrb[0].mxu0
  %719 = vmatprep.mubr.f32.mxu0 0.0
  %720 = vmatmul.mubr.f32.gmra.mrb[0].mxu0 %v526
  %v721 = vpop.f32.mrb[0].mxu0
  %v722 = vadd.f32 %v498, %v721
  %v723 = vpop.f32.mrb[0].mxu0
  %724 = vmatprep.mubr.f32.mxu0 0.0
  %725 = vmatmul.mubr.f32.gmra.mrb[0].mxu0 %v529
  %v726 = vpop.f32.mrb[0].mxu0
  %v727 = vadd.f32 %v498, %v726
  %v728 = vpop.f32.mrb[0].mxu0
  %729 = vmatprep.mubr.f32.mxu0 0.0
  %730 = vmatmul.mubr.f32.gmra.mrb[0].mxu0 %v532
  %v731 = vpop.f32.mrb[0].mxu0
  %v732 = vadd.f32 %v498, %v731
  %v733 = vpop.f32.mrb[0].mxu0
  %734 = vmatprep.mubr.f32.mxu0 0.0
  %735 = vmatmul.mubr.f32.gmra.mrb[0].mxu0 %v535
  %v736 = vpop.f32.mrb[0].mxu0
  %v737 = vadd.f32 %v498, %v736
  %v738 = vpop.f32.mrb[0].mxu0
  %739 = vmatprep.mubr.f32.mxu0 0.0
  %740 = vmatmul.mubr.f32.gmra.mrb[0].mxu0 %v538
  %v741 = vpop.f32.mrb[0].mxu0
  %v742 = vadd.f32 %v498, %v741
  %v743 = vpop.f32.mrb[0].mxu0
  %744 = vmatprep.mubr.f32.mxu0 0.0
  %745 = vmatmul.mubr.f32.gmra.mrb[0].mxu0 %v541
  %v746 = vpop.f32.mrb[0].mxu0
  %v747 = vadd.f32 %v498, %v746
  %v748 = vpop.f32.mrb[0].mxu0
  %749 = vmatprep.mubr.f32.mxu0 0.0
  %750 = vmatmul.mubr.f32.gmra.mrb[0].mxu0 %v544
  %v751 = vpop.f32.mrb[0].mxu0
  %v752 = vadd.f32 %v498, %v751
  %v753 = vpop.f32.mrb[0].mxu0
  %754 = vmatprep.mubr.f32.mxu0 0.0
  %755 = vmatmul.mubr.f32.gmra.mrb[0].mxu0 %v547
  %v756 = vpop.f32.mrb[0].mxu0
  %v757 = vadd.f32 %v498, %v756
  %v758 = vpop.f32.mrb[0].mxu0
  %759 = vmatprep.mubr.f32.mxu0 0.0
  %760 = vmatmul.mubr.f32.gmra.mrb[0].mxu0 %v550
  %v761 = vpop.f32.mrb[0].mxu0
  %v762 = vadd.f32 %v498, %v761
  %v763 = vpop.f32.mrb[0].mxu0
  %764 = vmatprep.mubr.f32.mxu0 0.0
  %765 = vmatmul.mubr.f32.gmra.mrb[0].mxu0 %v553
  %v766 = vpop.f32.mrb[0].mxu0
  %v767 = vadd.f32 %v498, %v766
  %v768 = vpop.f32.mrb[0].mxu0
  %769 = vmatprep.mubr.f32.mxu0 0.0
  %770 = vmatmul.mubr.f32.gmra.mrb[0].mxu0 %v556
  %v771 = vpop.f32.mrb[0].mxu0
  %v772 = vadd.f32 %v498, %v771
  %v773 = vpop.f32.mrb[0].mxu0
  %774 = vmatprep.mubr.f32.mxu0 0.0
  %775 = vmatmul.mubr.f32.gmra.mrb[0].mxu0 %v559
  %v776 = vpop.f32.mrb[0].mxu0
  %v777 = vadd.f32 %v498, %v776
  %v778 = vpop.f32.mrb[0].mxu0
  %779 = vmatprep.mubr.f32.mxu0 0.0
  %780 = vmatmul.mubr.f32.gmra.mrb[0].mxu0 %v562
  %v781 = vpop.f32.mrb[0].mxu0
  %v782 = vadd.f32 %v498, %v781
  %v783 = vpop.f32.mrb[0].mxu0
  %784 = vmatprep.mubr.f32.mxu0 0.0
  %785 = vmatmul.mubr.f32.gmra.mrb[0].mxu0 %v565
  %v786 = vpop.f32.mrb[0].mxu0
  %v787 = vadd.f32 %v498, %v786
  %v788 = vpop.f32.mrb[0].mxu0
  %789 = vmatprep.mubr.f32.mxu0 0.0
  %790 = vmatmul.mubr.f32.gmra.mrb[0].mxu0 %v568
  %v791 = vpop.f32.mrb[0].mxu0
  %v792 = vadd.f32 %v498, %v791
  %v793 = vpop.f32.mrb[0].mxu0
  %794 = vmatprep.mubr.f32.mxu0 0.0
  %795 = vmatmul.mubr.f32.gmra.mrb[0].mxu0 %v571
  %v796 = vpop.f32.mrb[0].mxu0
  %v797 = vadd.f32 %v498, %v796
  %v798 = vpop.f32.mrb[0].mxu0
  %799 = vmatprep.mubr.f32.mxu0 0.0
  %800 = vmatmul.mubr.f32.gmra.mrb[0].mxu0 %v574
  %v801 = vpop.f32.mrb[0].mxu0
  %v802 = vadd.f32 %v498, %v801
  %v803 = vpop.f32.mrb[0].mxu0
  %804 = vmatprep.mubr.f32.mxu0 0.0
  %805 = vmatmul.mubr.f32.gmra.mrb[0].mxu0 %v577
  %v806 = vpop.f32.mrb[0].mxu0
  %v807 = vadd.f32 %v498, %v806
  %v808 = vpop.f32.mrb[0].mxu0
  %809 = vmatprep.mubr.f32.mxu0 0.0
  %810 = vmatmul.mubr.f32.gmra.mrb[0].mxu0 %v580
  %v811 = vpop.f32.mrb[0].mxu0
  %v812 = vadd.f32 %v498, %v811
  %v813 = vpop.f32.mrb[0].mxu0
  %814 = vmatprep.mubr.f32.mxu0 0.0
  %815 = vmatmul.mubr.f32.gmra.mrb[0].mxu0 %v583
  %v816 = vpop.f32.mrb[0].mxu0
  %v817 = vadd.f32 %v498, %v816
  %v818 = vpop.f32.mrb[0].mxu0
  %819 = vmatprep.mubr.f32.mxu0 0.0
  %820 = vmatmul.mubr.f32.gmra.mrb[0].mxu0 %v586
  %v821 = vpop.f32.mrb[0].mxu0
  %v822 = vadd.f32 %v498, %v821
  %v823 = vpop.f32.mrb[0].mxu0
  %824 = vmatprep.mubr.f32.mxu0 0.0
  %825 = vmatmul.mubr.f32.gmra.mrb[0].mxu0 %v589
  %v826 = vpop.f32.mrb[0].mxu0
  %v827 = vadd.f32 %v498, %v826
  %v828 = vpop.f32.mrb[0].mxu0
  %829 = vmatprep.mubr.f32.mxu0 0.0
  %830 = vmatmul.mubr.f32.gmra.mrb[0].mxu0 %v592
  %v831 = vpop.f32.mrb[0].mxu0
  %v832 = vadd.f32 %v498, %v831
  %v833 = vpop.f32.mrb[0].mxu0
  %834 = vmatprep.mubr.f32.mxu0 0.0
  %835 = vmatmul.mubr.f32.gmra.mrb[0].mxu0 %v595
  %v836 = vpop.f32.mrb[0].mxu0
  %v837 = vadd.f32 %v498, %v836
  %v838 = vpop.f32.mrb[0].mxu0
  %839 = vmatprep.mubr.f32.mxu0 0.0
  %840 = vmatmul.mubr.f32.gmra.mrb[0].mxu0 %v598
  %v841 = vpop.f32.mrb[0].mxu0
  %v842 = vadd.f32 %v498, %v841
  %v843 = vpop.f32.mrb[0].mxu0
  %844 = vmatprep.mubr.f32.mxu0 0.0
  %845 = vmatmul.mubr.f32.gmra.mrb[0].mxu0 %v601
  %v846 = vpop.f32.mrb[0].mxu0
  %v847 = vadd.f32 %v498, %v846
  %v848 = vpop.f32.mrb[0].mxu0
  %849 = vmatprep.mubr.f32.mxu0 0.0
  %850 = vmatmul.mubr.f32.gmra.mrb[0].mxu0 %v604
  %v851 = vpop.f32.mrb[0].mxu0
  %v852 = vadd.f32 %v498, %v851
  %v853 = vpop.f32.mrb[0].mxu0
  %854 = vmatprep.mubr.f32.mxu0 0.0
  %855 = vmatmul.mubr.f32.gmra.mrb[0].mxu0 %v607
  %v856 = vpop.f32.mrb[0].mxu0
  %v857 = vadd.f32 %v498, %v856
  %v858 = vpop.f32.mrb[0].mxu0
  %859 = vmatprep.mubr.f32.mxu0 0.0
  %860 = vmatmul.mubr.f32.gmra.mrb[0].mxu0 %v610
  %v861 = vpop.f32.mrb[0].mxu0
  %v862 = vadd.f32 %v498, %v861
  %v863 = vpop.f32.mrb[0].mxu0
  %864 = vmatprep.mubr.f32.mxu0 0.0
  %865 = vmatmul.mubr.f32.gmra.mrb[0].mxu0 %v613
  %v866 = vpop.f32.mrb[0].mxu0
  %v867 = vadd.f32 %v498, %v866
  %v868 = vpop.f32.mrb[0].mxu0
  %869 = vdwg.mxu0
  %v870 = vmax.f32 %v682, 0.0
  %v871 = vmax.f32 %v687, 0.0
  %v872 = vmax.f32 %v692, 0.0
  %v873 = vmax.f32 %v697, 0.0
  %v874 = vmax.f32 %v702, 0.0
  %v875 = vmax.f32 %v707, 0.0
  %v876 = vmax.f32 %v712, 0.0
  %v877 = vmax.f32 %v717, 0.0
  %v878 = vmax.f32 %v722, 0.0
  %v879 = vmax.f32 %v727, 0.0
  %v880 = vmax.f32 %v732, 0.0
  %v881 = vmax.f32 %v737, 0.0
  %v882 = vmax.f32 %v742, 0.0
  %v883 = vmax.f32 %v747, 0.0
  %v884 = vmax.f32 %v752, 0.0
  %v885 = vmax.f32 %v757, 0.0
  %v886 = vmax.f32 %v762, 0.0
  %v887 = vmax.f32 %v767, 0.0
  %v888 = vmax.f32 %v772, 0.0
  %v889 = vmax.f32 %v777, 0.0
  %v890 = vmax.f32 %v782, 0.0
  %v891 = vmax.f32 %v787, 0.0
  %v892 = vmax.f32 %v792, 0.0
  %v893 = vmax.f32 %v797, 0.0
  %v894 = vmax.f32 %v802, 0.0
  %v895 = vmax.f32 %v807, 0.0
  %v896 = vmax.f32 %v812, 0.0
  %v897 = vmax.f32 %v817, 0.0
  %v898 = vmax.f32 %v822, 0.0
  %v899 = vmax.f32 %v827, 0.0
  %v900 = vmax.f32 %v832, 0.0
  %v901 = vmax.f32 %v837, 0.0
  %v902 = vmax.f32 %v842, 0.0
  %v903 = vmax.f32 %v847, 0.0
  %v904 = vmax.f32 %v852, 0.0
  %v905 = vmax.f32 %v857, 0.0
  %v906 = vmax.f32 %v862, 0.0
  %v907 = vmax.f32 %v867, 0.0
  %908 = vst.msk [vmem:[%s7] sm:$0xff] %vm500, %v870
  %909 = vst.msk [vmem:[%s7 + $0x8] sm:$0xff] %vm500, %v871
  %910 = vst.msk [vmem:[%s7 + $0x10] sm:$0xff] %vm500, %v872
  %911 = vst.msk [vmem:[%s7 + $0x18] sm:$0xff] %vm500, %v873
  %912 = vst.msk [vmem:[%s7 + $0x20] sm:$0xff] %vm500, %v874
  %913 = vst.msk [vmem:[%s7 + $0x28] sm:$0xff] %vm500, %v875
  %914 = vst.msk [vmem:[%s7 + $0x30] sm:$0xff] %vm500, %v876
  %915 = vst.msk [vmem:[%s7 + $0x38] sm:$0xff] %vm500, %v877
  %916 = vst.msk [vmem:[%s7 + $0x40] sm:$0xff] %vm500, %v878
  %917 = vst.msk [vmem:[%s7 + $0x48] sm:$0xff] %vm500, %v879
  %918 = vst.msk [vmem:[%s7 + $0x50] sm:$0xff] %vm500, %v880
  %919 = vst.msk [vmem:[%s7 + $0x58] sm:$0xff] %vm500, %v881
  %920 = vst.msk [vmem:[%s7 + $0x60] sm:$0xff] %vm500, %v882
  %921 = vst.msk [vmem:[%s7 + $0x68] sm:$0xff] %vm500, %v883
  %922 = vst.msk [vmem:[%s7 + $0x70] sm:$0xff] %vm500, %v884
  %923 = vst.msk [vmem:[%s7 + $0x78] sm:$0xff] %vm500, %v885
  %924 = vst.msk [vmem:[%s7 + $0x80] sm:$0xff] %vm500, %v886
  %925 = vst.msk [vmem:[%s7 + $0x88] sm:$0xff] %vm500, %v887
  %926 = vst.msk [vmem:[%s7 + $0x90] sm:$0xff] %vm500, %v888
  %927 = vst.msk [vmem:[%s7 + $0x98] sm:$0xff] %vm500, %v889
  %928 = vst.msk [vmem:[%s7 + $0xa0] sm:$0xff] %vm500, %v890
  %929 = vst.msk [vmem:[%s7 + $0xa8] sm:$0xff] %vm500, %v891
  %930 = vst.msk [vmem:[%s7 + $0xb0] sm:$0xff] %vm500, %v892
  %931 = vst.msk [vmem:[%s7 + $0xb8] sm:$0xff] %vm500, %v893
  %932 = vst.msk [vmem:[%s7 + $0xc0] sm:$0xff] %vm500, %v894
  %933 = vst.msk [vmem:[%s7 + $0xc8] sm:$0xff] %vm500, %v895
  %934 = vst.msk [vmem:[%s7 + $0xd0] sm:$0xff] %vm500, %v896
  %935 = vst.msk [vmem:[%s7 + $0xd8] sm:$0xff] %vm500, %v897
  %936 = vst.msk [vmem:[%s7 + $0xe0] sm:$0xff] %vm500, %v898
  %937 = vst.msk [vmem:[%s7 + $0xe8] sm:$0xff] %vm500, %v899
  %938 = vst.msk [vmem:[%s7 + $0xf0] sm:$0xff] %vm500, %v900
  %939 = vst.msk [vmem:[%s7 + $0xf8] sm:$0xff] %vm500, %v901
  %940 = vst.msk [vmem:[%s7 + $0x100] sm:$0xff] %vm500, %v902
  %941 = vst.msk [vmem:[%s7 + $0x108] sm:$0xff] %vm500, %v903
  %942 = vst.msk [vmem:[%s7 + $0x110] sm:$0xff] %vm500, %v904
  %943 = vst.msk [vmem:[%s7 + $0x118] sm:$0xff] %vm500, %v905
  %944 = vst.msk [vmem:[%s7 + $0x120] sm:$0xff] %vm500, %v906
  %945 = vst.msk [vmem:[%s7 + $0x128] sm:$0xff] %vm500, %v907
  %v946 = vld [vmem:[%s5] sm:$0xff]
  %v947 = vld [vmem:[%s5 + $0x8] sm:$0xff]
  %v948 = vld [vmem:[%s5 + $0x10] sm:$0xff]
  %v949 = vld [vmem:[%s5 + $0x18] sm:$0xff]
  %v950 = vld [vmem:[%s5 + $0x20] sm:$0xff]
  %v951 = vld [vmem:[%s5 + $0x28] sm:$0xff]
  %v952 = vld [vmem:[%s5 + $0x30] sm:$0xff]
  %v953 = vld [vmem:[%s5 + $0x38] sm:$0xff]
  %v954 = vld [vmem:[%s6] sm:$0x1]
  %v956 = vlaneseq
  %v957 = vshrl.u32 %v956, 7
  %v958 = vsub.s32 0, %v957
  %v959 = vrot.slane %v954, %v958
  %v962 = vsel %vm500, %v870, 0
  %v965 = vsel %vm500, %v871, 0
  %v968 = vsel %vm500, %v872, 0
  %v971 = vsel %vm500, %v873, 0
  %v974 = vsel %vm500, %v874, 0
  %v977 = vsel %vm500, %v875, 0
  %v980 = vsel %vm500, %v876, 0
  %v983 = vsel %vm500, %v877, 0
  %v986 = vsel %vm500, %v878, 0
  %v989 = vsel %vm500, %v879, 0
  %v992 = vsel %vm500, %v880, 0
  %v995 = vsel %vm500, %v881, 0
  %v998 = vsel %vm500, %v882, 0
  %v1001 = vsel %vm500, %v883, 0
  %v1004 = vsel %vm500, %v884, 0
  %v1007 = vsel %vm500, %v885, 0
  %v1010 = vsel %vm500, %v886, 0
  %v1013 = vsel %vm500, %v887, 0
  %v1016 = vsel %vm500, %v888, 0
  %v1019 = vsel %vm500, %v889, 0
  %v1022 = vsel %vm500, %v890, 0
  %v1025 = vsel %vm500, %v891, 0
  %v1028 = vsel %vm500, %v892, 0
  %v1031 = vsel %vm500, %v893, 0
  %v1034 = vsel %vm500, %v894, 0
  %v1037 = vsel %vm500, %v895, 0
  %v1040 = vsel %vm500, %v896, 0
  %v1043 = vsel %vm500, %v897, 0
  %v1046 = vsel %vm500, %v898, 0
  %v1049 = vsel %vm500, %v899, 0
  %v1052 = vsel %vm500, %v900, 0
  %v1055 = vsel %vm500, %v901, 0
  %v1058 = vsel %vm500, %v902, 0
  %v1061 = vsel %vm500, %v903, 0
  %v1064 = vsel %vm500, %v904, 0
  %v1067 = vsel %vm500, %v905, 0
  %v1070 = vsel %vm500, %v906, 0
  %v1073 = vsel %vm500, %v907, 0
  %1075 = vmatprep.subr.mxu0 0.0
  %1076 = vmatpush1.msra.mxu0 %v946
  %1077 = vmatprep.subr.mxu0 0.0
  %1078 = vmatpush1.msra.mxu0 %v947
  %1079 = vmatprep.subr.mxu0 0.0
  %1080 = vmatpush1.msra.mxu0 %v948
  %1081 = vmatprep.subr.mxu0 0.0
  %1082 = vmatpush1.msra.mxu0 %v949
  %1083 = vmatprep.subr.mxu0 0.0
  %1084 = vmatpush1.msra.mxu0 %v950
  %1085 = vmatprep.subr.mxu0 0.0
  %1086 = vmatpush1.msra.mxu0 %v951
  %1087 = vmatprep.subr.mxu0 0.0
  %1088 = vmatpush1.msra.mxu0 %v952
  %1089 = vmatprep.subr.mxu0 0.0
  %1090 = vmatpush1.msra.mxu0 %v953
  %1091 = vmatprep.subr.mxu0 0.0
  %1092 = vmatpush1.msra.mxu0 0.0
  %1093 = vmatprep.subr.mxu0 0.0
  %1094 = vmatpush1.msra.mxu0 0.0
  %1095 = vmatprep.subr.mxu0 0.0
  %1096 = vmatpush1.msra.mxu0 0.0
  %1097 = vmatprep.subr.mxu0 0.0
  %1098 = vmatpush1.msra.mxu0 0.0
  %1099 = vmatprep.subr.mxu0 0.0
  %1100 = vmatpush1.msra.mxu0 0.0
  %1101 = vmatprep.subr.mxu0 0.0
  %1102 = vmatpush1.msra.mxu0 0.0
  %1103 = vmatprep.subr.mxu0 0.0
  %1104 = vmatpush1.msra.mxu0 0.0
  %1105 = vmatprep.subr.mxu0 0.0
  %1106 = vmatpush1.msra.mxu0 0.0
  %1107 = vmatprep.subr.mxu0 0.0
  %1108 = vmatpush1.msra.mxu0 0.0
  %1109 = vmatprep.subr.mxu0 0.0
  %1110 = vmatpush1.msra.mxu0 0.0
  %1111 = vmatprep.subr.mxu0 0.0
  %1112 = vmatpush1.msra.mxu0 0.0
  %1113 = vmatprep.subr.mxu0 0.0
  %1114 = vmatpush1.msra.mxu0 0.0
  %1115 = vmatprep.subr.mxu0 0.0
  %1116 = vmatpush1.msra.mxu0 0.0
  %1117 = vmatprep.subr.mxu0 0.0
  %1118 = vmatpush1.msra.mxu0 0.0
  %1119 = vmatprep.subr.mxu0 0.0
  %1120 = vmatpush1.msra.mxu0 0.0
  %1121 = vmatprep.subr.mxu0 0.0
  %1122 = vmatpush1.msra.mxu0 0.0
  %1123 = vmatprep.subr.mxu0 0.0
  %1124 = vmatpush1.msra.mxu0 0.0
  %1125 = vmatprep.subr.mxu0 0.0
  %1126 = vmatpush1.msra.mxu0 0.0
  %1127 = vmatprep.subr.mxu0 0.0
  %1128 = vmatpush1.msra.mxu0 0.0
  %1129 = vmatprep.subr.mxu0 0.0
  %1130 = vmatpush1.msra.mxu0 0.0
  %1131 = vmatprep.subr.mxu0 0.0
  %1132 = vmatpush1.msra.mxu0 0.0
  %1133 = vmatprep.subr.mxu0 0.0
  %1134 = vmatpush1.msra.mxu0 0.0
  %1135 = vmatprep.subr.mxu0 0.0
  %1136 = vmatpush1.msra.mxu0 0.0
  %1137 = vmatprep.subr.mxu0 0.0
  %1138 = vmatpush1.msra.mxu0 0.0
  %1139 = vmatprep.mubr.f32.mxu0 0.0
  %1140 = vmatmul.mubr.f32.gmra.mrb[0].mxu0 %v962
  %v1141 = vpop.f32.mrb[0].mxu0
  %v1142 = vadd.f32 %v959, %v1141
  %v1143 = vpop.f32.mrb[0].mxu0
  %1144 = vmatprep.mubr.f32.mxu0 0.0
  %1145 = vmatmul.mubr.f32.gmra.mrb[0].mxu0 %v965
  %v1146 = vpop.f32.mrb[0].mxu0
  %v1147 = vadd.f32 %v959, %v1146
  %v1148 = vpop.f32.mrb[0].mxu0
  %1149 = vmatprep.mubr.f32.mxu0 0.0
  %1150 = vmatmul.mubr.f32.gmra.mrb[0].mxu0 %v968
  %v1151 = vpop.f32.mrb[0].mxu0
  %v1152 = vadd.f32 %v959, %v1151
  %v1153 = vpop.f32.mrb[0].mxu0
  %1154 = vmatprep.mubr.f32.mxu0 0.0
  %1155 = vmatmul.mubr.f32.gmra.mrb[0].mxu0 %v971
  %v1156 = vpop.f32.mrb[0].mxu0
  %v1157 = vadd.f32 %v959, %v1156
  %v1158 = vpop.f32.mrb[0].mxu0
  %1159 = vmatprep.mubr.f32.mxu0 0.0
  %1160 = vmatmul.mubr.f32.gmra.mrb[0].mxu0 %v974
  %v1161 = vpop.f32.mrb[0].mxu0
  %v1162 = vadd.f32 %v959, %v1161
  %v1163 = vpop.f32.mrb[0].mxu0
  %1164 = vmatprep.mubr.f32.mxu0 0.0
  %1165 = vmatmul.mubr.f32.gmra.mrb[0].mxu0 %v977
  %v1166 = vpop.f32.mrb[0].mxu0
  %v1167 = vadd.f32 %v959, %v1166
  %v1168 = vpop.f32.mrb[0].mxu0
  %1169 = vmatprep.mubr.f32.mxu0 0.0
  %1170 = vmatmul.mubr.f32.gmra.mrb[0].mxu0 %v980
  %v1171 = vpop.f32.mrb[0].mxu0
  %v1172 = vadd.f32 %v959, %v1171
  %v1173 = vpop.f32.mrb[0].mxu0
  %1174 = vmatprep.mubr.f32.mxu0 0.0
  %1175 = vmatmul.mubr.f32.gmra.mrb[0].mxu0 %v983
  %v1176 = vpop.f32.mrb[0].mxu0
  %v1177 = vadd.f32 %v959, %v1176
  %v1178 = vpop.f32.mrb[0].mxu0
  %1179 = vmatprep.mubr.f32.mxu0 0.0
  %1180 = vmatmul.mubr.f32.gmra.mrb[0].mxu0 %v986
  %v1181 = vpop.f32.mrb[0].mxu0
  %v1182 = vadd.f32 %v959, %v1181
  %v1183 = vpop.f32.mrb[0].mxu0
  %1184 = vmatprep.mubr.f32.mxu0 0.0
  %1185 = vmatmul.mubr.f32.gmra.mrb[0].mxu0 %v989
  %v1186 = vpop.f32.mrb[0].mxu0
  %v1187 = vadd.f32 %v959, %v1186
  %v1188 = vpop.f32.mrb[0].mxu0
  %1189 = vmatprep.mubr.f32.mxu0 0.0
  %1190 = vmatmul.mubr.f32.gmra.mrb[0].mxu0 %v992
  %v1191 = vpop.f32.mrb[0].mxu0
  %v1192 = vadd.f32 %v959, %v1191
  %v1193 = vpop.f32.mrb[0].mxu0
  %1194 = vmatprep.mubr.f32.mxu0 0.0
  %1195 = vmatmul.mubr.f32.gmra.mrb[0].mxu0 %v995
  %v1196 = vpop.f32.mrb[0].mxu0
  %v1197 = vadd.f32 %v959, %v1196
  %v1198 = vpop.f32.mrb[0].mxu0
  %1199 = vmatprep.mubr.f32.mxu0 0.0
  %1200 = vmatmul.mubr.f32.gmra.mrb[0].mxu0 %v998
  %v1201 = vpop.f32.mrb[0].mxu0
  %v1202 = vadd.f32 %v959, %v1201
  %v1203 = vpop.f32.mrb[0].mxu0
  %1204 = vmatprep.mubr.f32.mxu0 0.0
  %1205 = vmatmul.mubr.f32.gmra.mrb[0].mxu0 %v1001
  %v1206 = vpop.f32.mrb[0].mxu0
  %v1207 = vadd.f32 %v959, %v1206
  %v1208 = vpop.f32.mrb[0].mxu0
  %1209 = vmatprep.mubr.f32.mxu0 0.0
  %1210 = vmatmul.mubr.f32.gmra.mrb[0].mxu0 %v1004
  %v1211 = vpop.f32.mrb[0].mxu0
  %v1212 = vadd.f32 %v959, %v1211
  %v1213 = vpop.f32.mrb[0].mxu0
  %1214 = vmatprep.mubr.f32.mxu0 0.0
  %1215 = vmatmul.mubr.f32.gmra.mrb[0].mxu0 %v1007
  %v1216 = vpop.f32.mrb[0].mxu0
  %v1217 = vadd.f32 %v959, %v1216
  %v1218 = vpop.f32.mrb[0].mxu0
  %1219 = vmatprep.mubr.f32.mxu0 0.0
  %1220 = vmatmul.mubr.f32.gmra.mrb[0].mxu0 %v1010
  %v1221 = vpop.f32.mrb[0].mxu0
  %v1222 = vadd.f32 %v959, %v1221
  %v1223 = vpop.f32.mrb[0].mxu0
  %1224 = vmatprep.mubr.f32.mxu0 0.0
  %1225 = vmatmul.mubr.f32.gmra.mrb[0].mxu0 %v1013
  %v1226 = vpop.f32.mrb[0].mxu0
  %v1227 = vadd.f32 %v959, %v1226
  %v1228 = vpop.f32.mrb[0].mxu0
  %1229 = vmatprep.mubr.f32.mxu0 0.0
  %1230 = vmatmul.mubr.f32.gmra.mrb[0].mxu0 %v1016
  %v1231 = vpop.f32.mrb[0].mxu0
  %v1232 = vadd.f32 %v959, %v1231
  %v1233 = vpop.f32.mrb[0].mxu0
  %1234 = vmatprep.mubr.f32.mxu0 0.0
  %1235 = vmatmul.mubr.f32.gmra.mrb[0].mxu0 %v1019
  %v1236 = vpop.f32.mrb[0].mxu0
  %v1237 = vadd.f32 %v959, %v1236
  %v1238 = vpop.f32.mrb[0].mxu0
  %1239 = vmatprep.mubr.f32.mxu0 0.0
  %1240 = vmatmul.mubr.f32.gmra.mrb[0].mxu0 %v1022
  %v1241 = vpop.f32.mrb[0].mxu0
  %v1242 = vadd.f32 %v959, %v1241
  %v1243 = vpop.f32.mrb[0].mxu0
  %1244 = vmatprep.mubr.f32.mxu0 0.0
  %1245 = vmatmul.mubr.f32.gmra.mrb[0].mxu0 %v1025
  %v1246 = vpop.f32.mrb[0].mxu0
  %v1247 = vadd.f32 %v959, %v1246
  %v1248 = vpop.f32.mrb[0].mxu0
  %1249 = vmatprep.mubr.f32.mxu0 0.0
  %1250 = vmatmul.mubr.f32.gmra.mrb[0].mxu0 %v1028
  %v1251 = vpop.f32.mrb[0].mxu0
  %v1252 = vadd.f32 %v959, %v1251
  %v1253 = vpop.f32.mrb[0].mxu0
  %1254 = vmatprep.mubr.f32.mxu0 0.0
  %1255 = vmatmul.mubr.f32.gmra.mrb[0].mxu0 %v1031
  %v1256 = vpop.f32.mrb[0].mxu0
  %v1257 = vadd.f32 %v959, %v1256
  %v1258 = vpop.f32.mrb[0].mxu0
  %1259 = vmatprep.mubr.f32.mxu0 0.0
  %1260 = vmatmul.mubr.f32.gmra.mrb[0].mxu0 %v1034
  %v1261 = vpop.f32.mrb[0].mxu0
  %v1262 = vadd.f32 %v959, %v1261
  %v1263 = vpop.f32.mrb[0].mxu0
  %1264 = vmatprep.mubr.f32.mxu0 0.0
  %1265 = vmatmul.mubr.f32.gmra.mrb[0].mxu0 %v1037
  %v1266 = vpop.f32.mrb[0].mxu0
  %v1267 = vadd.f32 %v959, %v1266
  %v1268 = vpop.f32.mrb[0].mxu0
  %1269 = vmatprep.mubr.f32.mxu0 0.0
  %1270 = vmatmul.mubr.f32.gmra.mrb[0].mxu0 %v1040
  %v1271 = vpop.f32.mrb[0].mxu0
  %v1272 = vadd.f32 %v959, %v1271
  %v1273 = vpop.f32.mrb[0].mxu0
  %1274 = vmatprep.mubr.f32.mxu0 0.0
  %1275 = vmatmul.mubr.f32.gmra.mrb[0].mxu0 %v1043
  %v1276 = vpop.f32.mrb[0].mxu0
  %v1277 = vadd.f32 %v959, %v1276
  %v1278 = vpop.f32.mrb[0].mxu0
  %1279 = vmatprep.mubr.f32.mxu0 0.0
  %1280 = vmatmul.mubr.f32.gmra.mrb[0].mxu0 %v1046
  %v1281 = vpop.f32.mrb[0].mxu0
  %v1282 = vadd.f32 %v959, %v1281
  %v1283 = vpop.f32.mrb[0].mxu0
  %1284 = vmatprep.mubr.f32.mxu0 0.0
  %1285 = vmatmul.mubr.f32.gmra.mrb[0].mxu0 %v1049
  %v1286 = vpop.f32.mrb[0].mxu0
  %v1287 = vadd.f32 %v959, %v1286
  %v1288 = vpop.f32.mrb[0].mxu0
  %1289 = vmatprep.mubr.f32.mxu0 0.0
  %1290 = vmatmul.mubr.f32.gmra.mrb[0].mxu0 %v1052
  %v1291 = vpop.f32.mrb[0].mxu0
  %v1292 = vadd.f32 %v959, %v1291
  %v1293 = vpop.f32.mrb[0].mxu0
  %1294 = vmatprep.mubr.f32.mxu0 0.0
  %1295 = vmatmul.mubr.f32.gmra.mrb[0].mxu0 %v1055
  %v1296 = vpop.f32.mrb[0].mxu0
  %v1297 = vadd.f32 %v959, %v1296
  %v1298 = vpop.f32.mrb[0].mxu0
  %1299 = vmatprep.mubr.f32.mxu0 0.0
  %1300 = vmatmul.mubr.f32.gmra.mrb[0].mxu0 %v1058
  %v1301 = vpop.f32.mrb[0].mxu0
  %v1302 = vadd.f32 %v959, %v1301
  %v1303 = vpop.f32.mrb[0].mxu0
  %1304 = vmatprep.mubr.f32.mxu0 0.0
  %1305 = vmatmul.mubr.f32.gmra.mrb[0].mxu0 %v1061
  %v1306 = vpop.f32.mrb[0].mxu0
  %v1307 = vadd.f32 %v959, %v1306
  %v1308 = vpop.f32.mrb[0].mxu0
  %1309 = vmatprep.mubr.f32.mxu0 0.0
  %1310 = vmatmul.mubr.f32.gmra.mrb[0].mxu0 %v1064
  %v1311 = vpop.f32.mrb[0].mxu0
  %v1312 = vadd.f32 %v959, %v1311
  %v1313 = vpop.f32.mrb[0].mxu0
  %1314 = vmatprep.mubr.f32.mxu0 0.0
  %1315 = vmatmul.mubr.f32.gmra.mrb[0].mxu0 %v1067
  %v1316 = vpop.f32.mrb[0].mxu0
  %v1317 = vadd.f32 %v959, %v1316
  %v1318 = vpop.f32.mrb[0].mxu0
  %1319 = vmatprep.mubr.f32.mxu0 0.0
  %1320 = vmatmul.mubr.f32.gmra.mrb[0].mxu0 %v1070
  %v1321 = vpop.f32.mrb[0].mxu0
  %v1322 = vadd.f32 %v959, %v1321
  %v1323 = vpop.f32.mrb[0].mxu0
  %1324 = vmatprep.mubr.f32.mxu0 0.0
  %1325 = vmatmul.mubr.f32.gmra.mrb[0].mxu0 %v1073
  %v1326 = vpop.f32.mrb[0].mxu0
  %v1327 = vadd.f32 %v959, %v1326
  %v1328 = vpop.f32.mrb[0].mxu0
  %1329 = vdwg.mxu0
  %vm1330 = vcmask 130048
  %1331 = vst.msk [vmem:[%s8] sm:$0xff] %vm1330, %v1142
  %1332 = vst.msk [vmem:[%s8 + $0x8] sm:$0xff] %vm1330, %v1147
  %1333 = vst.msk [vmem:[%s8 + $0x10] sm:$0xff] %vm1330, %v1152
  %1334 = vst.msk [vmem:[%s8 + $0x18] sm:$0xff] %vm1330, %v1157
  %1335 = vst.msk [vmem:[%s8 + $0x20] sm:$0xff] %vm1330, %v1162
  %1336 = vst.msk [vmem:[%s8 + $0x28] sm:$0xff] %vm1330, %v1167
  %1337 = vst.msk [vmem:[%s8 + $0x30] sm:$0xff] %vm1330, %v1172
  %1338 = vst.msk [vmem:[%s8 + $0x38] sm:$0xff] %vm1330, %v1177
  %1339 = vst.msk [vmem:[%s8 + $0x40] sm:$0xff] %vm1330, %v1182
  %1340 = vst.msk [vmem:[%s8 + $0x48] sm:$0xff] %vm1330, %v1187
  %1341 = vst.msk [vmem:[%s8 + $0x50] sm:$0xff] %vm1330, %v1192
  %1342 = vst.msk [vmem:[%s8 + $0x58] sm:$0xff] %vm1330, %v1197
  %1343 = vst.msk [vmem:[%s8 + $0x60] sm:$0xff] %vm1330, %v1202
  %1344 = vst.msk [vmem:[%s8 + $0x68] sm:$0xff] %vm1330, %v1207
  %1345 = vst.msk [vmem:[%s8 + $0x70] sm:$0xff] %vm1330, %v1212
  %1346 = vst.msk [vmem:[%s8 + $0x78] sm:$0xff] %vm1330, %v1217
  %1347 = vst.msk [vmem:[%s8 + $0x80] sm:$0xff] %vm1330, %v1222
  %1348 = vst.msk [vmem:[%s8 + $0x88] sm:$0xff] %vm1330, %v1227
  %1349 = vst.msk [vmem:[%s8 + $0x90] sm:$0xff] %vm1330, %v1232
  %1350 = vst.msk [vmem:[%s8 + $0x98] sm:$0xff] %vm1330, %v1237
  %1351 = vst.msk [vmem:[%s8 + $0xa0] sm:$0xff] %vm1330, %v1242
  %1352 = vst.msk [vmem:[%s8 + $0xa8] sm:$0xff] %vm1330, %v1247
  %1353 = vst.msk [vmem:[%s8 + $0xb0] sm:$0xff] %vm1330, %v1252
  %1354 = vst.msk [vmem:[%s8 + $0xb8] sm:$0xff] %vm1330, %v1257
  %1355 = vst.msk [vmem:[%s8 + $0xc0] sm:$0xff] %vm1330, %v1262
  %1356 = vst.msk [vmem:[%s8 + $0xc8] sm:$0xff] %vm1330, %v1267
  %1357 = vst.msk [vmem:[%s8 + $0xd0] sm:$0xff] %vm1330, %v1272
  %1358 = vst.msk [vmem:[%s8 + $0xd8] sm:$0xff] %vm1330, %v1277
  %1359 = vst.msk [vmem:[%s8 + $0xe0] sm:$0xff] %vm1330, %v1282
  %1360 = vst.msk [vmem:[%s8 + $0xe8] sm:$0xff] %vm1330, %v1287
  %1361 = vst.msk [vmem:[%s8 + $0xf0] sm:$0xff] %vm1330, %v1292
  %1362 = vst.msk [vmem:[%s8 + $0xf8] sm:$0xff] %vm1330, %v1297
  %1363 = vst.msk [vmem:[%s8 + $0x100] sm:$0xff] %vm1330, %v1302
  %1364 = vst.msk [vmem:[%s8 + $0x108] sm:$0xff] %vm1330, %v1307
  %1365 = vst.msk [vmem:[%s8 + $0x110] sm:$0xff] %vm1330, %v1312
  %1366 = vst.msk [vmem:[%s8 + $0x118] sm:$0xff] %vm1330, %v1317
  %1367 = vst.msk [vmem:[%s8 + $0x120] sm:$0xff] %vm1330, %v1322
  %1368 = vst.msk [vmem:[%s8 + $0x128] sm:$0xff] %vm1330, %v1327
  // Predicated region
  $region30: #{tpu_custom_call.1} parent=0 // pred_check
    _
  $region31: #{tpu_custom_call.1} parent=0 // pred_check_branch
    %1370 = sbr.rel (0) target = $region33
  $region32: #{tpu_custom_call.1} parent=0 // pred_region
    _
  $region33: #{tpu_custom_call.1} parent=0 // pred_fallthru
    _
  // Predicated region
  $region34: #{tpu_custom_call.1} parent=0 // pred_check
    _
  $region35: #{tpu_custom_call.1} parent=0 // pred_check_branch
    %1372 = sbr.rel (0) target = $region37
  $region36: #{tpu_custom_call.1} parent=0 // pred_region
    _
  $region37: #{tpu_custom_call.1} parent=0 // pred_fallthru
    _
  // Predicated region
  $region38: #{tpu_custom_call.1} parent=0 // pred_check
    _
  $region39: #{tpu_custom_call.1} parent=0 // pred_check_branch
    %1374 = sbr.rel (0) target = $region41
  $region40: #{tpu_custom_call.1} parent=0 // pred_region
    _
  $region41: #{tpu_custom_call.1} parent=0 // pred_fallthru
    _
  // Predicated region
  $region42: #{tpu_custom_call.1} parent=0 // pred_check
    _
  $region43: #{tpu_custom_call.1} parent=0 // pred_check_branch
    %1376 = sbr.rel (0) target = $region45
  $region44: #{tpu_custom_call.1} parent=0 // pred_region
    _
  $region45: #{tpu_custom_call.1} parent=0 // pred_fallthru
    _

</llo_original>
